<compile_context>
chip_gen: v6e
topology: v6e:2x2x1
jax: 0.10.0
libtpu: 0.0.40
codegen_flags: <defaults>
</compile_context>

<pallas_src>
import functools

import jax
import jax.numpy as jnp
from jax.experimental import pallas as pl
from jax.experimental.pallas import tpu as pltpu


# ----------------------------------------------------------------------------
# discriminate kernel (batch-tiled, resident weights, bf16 MXU / f32 accumulate)
# ----------------------------------------------------------------------------
def _disc_kernel(x_ref, mean_ref, inv_std_ref,
                 w1_ref, b1_ref, w2_ref, b2_ref, w3_ref, b3_ref,
                 out_ref):
    x = x_ref[...]                                           # [TB, A] f32
    # RunningNorm apply: (x - mean) * rsqrt(var + eps) (inv_std hoisted), clamp [-5, 5]
    norm = (x - mean_ref[...]) * inv_std_ref[...]
    norm = jnp.clip(norm, -5.0, 5.0).astype(jnp.bfloat16)
    # _disc_mlp layer 1: Linear(A, 1024) + ReLU  (bf16 MXU, f32 accumulate)
    h1 = jnp.dot(norm, w1_ref[...], preferred_element_type=jnp.float32) + b1_ref[...]
    h1 = jnp.maximum(h1, 0.0).astype(jnp.bfloat16)
    # _disc_mlp layer 2: Linear(1024, H) + ReLU
    h2 = jnp.dot(h1, w2_ref[...], preferred_element_type=jnp.float32) + b2_ref[...]
    h2 = jnp.maximum(h2, 0.0)
    # _disc_logits: Linear(H, 1) as VPU multiply + cross-lane reduce (keeps MXU slot free)
    logits = jnp.sum(h2 * w3_ref[...], axis=-1, keepdims=True) + b3_ref[...]   # [TB, 1]
    # (TB, 1) store: rows past B in a partial final tile are dropped by Pallas on writeback
    out_ref[...] = logits


def prepare_disc_params(params, *, eps=1e-5):
    """One-time (per parameter update) preprocessing: bf16 weight casts + inv_std.

    Doing this here instead of inside discriminate() avoids re-reading/re-writing the
    full weight matrices in HBM on every forward call.
    """
    return {
        "amp_mean": params["amp_mean"],
        "inv_std": jax.lax.rsqrt(params["amp_var"] + jnp.float32(eps)),
        "w1": params["w1"].astype(jnp.bfloat16),
        "b1": params["b1"],
        "w2": params["w2"].astype(jnp.bfloat16),
        "b2": params["b2"],
        "w3_row": params["w3"].reshape(1, -1).astype(jnp.float32),   # (1, H) for VPU reduce
        "b3": params["b3"],
    }


def discriminate(amp_obs, prepared, *, tile_b=1024):
    B, A = amp_obs.shape
    H = prepared["w2"].shape[1]
    # TB == B (single full block, always legal) or a multiple-of-8 tile with a partial tail.
    TB = B if B <= tile_b else tile_b
    grid = (pl.cdiv(B, TB),)

    const = lambda i: (0, 0)   # resident (fetched once) blocks
    out = pl.pallas_call(
        _disc_kernel,
        out_shape=jax.ShapeDtypeStruct((B, 1), jnp.float32),
        grid=grid,
        in_specs=[
            pl.BlockSpec((TB, A), lambda i: (i, 0)),        # x tile (pipelined)
            pl.BlockSpec((1, A), const),                    # mean
            pl.BlockSpec((1, A), const),                    # inv_std
            pl.BlockSpec((A, 1024), const),                 # w1 (bf16)
            pl.BlockSpec((1, 1024), const),                 # b1
            pl.BlockSpec((1024, H), const),                 # w2 (bf16)
            pl.BlockSpec((1, H), const),                    # b2
            pl.BlockSpec((1, H), const),                    # w3 row
            pl.BlockSpec((1, 1), const),                    # b3
        ],
        out_specs=pl.BlockSpec((TB, 1), lambda i: (i, 0)),  # real (B,1) logits, no lane padding
        compiler_params=pltpu.CompilerParams(
            dimension_semantics=("parallel",),              # batch tiles independent -> megacore
            vmem_limit_bytes=48 << 20),                     # <= 48 MiB: safe on 64 MiB v7x
    )(amp_obs, prepared["amp_mean"], prepared["inv_std"],
      prepared["w1"], prepared["b1"], prepared["w2"], prepared["b2"],
      prepared["w3_row"], prepared["b3"])
    return out                                              # (B, 1)


# ----------------------------------------------------------------------------
# bound_loss kernel (lane-dense flatten, batch-tiled, SMEM scalar accumulator)
# ----------------------------------------------------------------------------
def _bound_loss_kernel(mu_ref, out_ref, acc_ref, *, soft_bound, rows, total, tile_rows):
    i = pl.program_id(0)

    @pl.when(i == 0)
    def _():
        acc_ref[0] = jnp.float32(0.0)

    mu = mu_ref[...]                                         # [TR, C] f32
    sb = jnp.float32(soft_bound)
    zero = jnp.zeros_like(mu)
    loss = jnp.where(mu > sb, (mu - sb) ** 2, zero)
    loss = jnp.where(mu < -sb, (mu + sb) ** 2, loss)
    # mask rows of a partial final tile (unspecified padded data)
    row = i * tile_rows + jax.lax.broadcasted_iota(jnp.int32, mu.shape, 0)
    loss = jnp.where(row < rows, loss, 0.0)
    acc_ref[0] += jnp.sum(loss)

    @pl.when(i == pl.num_programs(0) - 1)
    def _():
        out_ref[0] = acc_ref[0] / jnp.float32(total)         # torch .mean() over all elements


def bound_loss(mu, soft_bound, *, tile_rows=2048):
    B, act = mu.shape
    total = B * act
    # Lane-dense view when it is free (contiguous reshape, no pad/copy); otherwise keep (B, act)
    # whose last block dim equals the full array dim (legal, HBM traffic unchanged).
    if total >= 128 and total % 128 == 0:
        x = mu.reshape(total // 128, 128)
    else:
        x = mu
    R, C = x.shape
    TR = R if R <= tile_rows else tile_rows                  # tile_rows is a multiple of 8
    grid = (pl.cdiv(R, TR),)
    kernel = functools.partial(_bound_loss_kernel, soft_bound=float(soft_bound),
                               rows=R, total=total, tile_rows=TR)
    out = pl.pallas_call(
        kernel,
        out_shape=jax.ShapeDtypeStruct((1,), jnp.float32),
        grid=grid,
        in_specs=[pl.BlockSpec((TR, C), lambda i: (i, 0))],
        out_specs=pl.BlockSpec(memory_space=pltpu.MemorySpace.SMEM),
        scratch_shapes=[pltpu.SMEM((1,), jnp.float32)],
        compiler_params=pltpu.CompilerParams(
            dimension_semantics=("arbitrary",)),             # serial: SMEM accumulator carried
    )(x)
    return out[0]


# ----------------------------------------------------------------------------
# deterministic parameter construction (synthetic; mirrors __init__ shapes)
# ----------------------------------------------------------------------------
def init_params(key, amp_obs_size, hidden_size, action_size):
    ks = jax.random.split(key, 6)
    scale = 0.02
    params = {
        # RunningNorm state (apply-only here; the running update is host-side stateful logic)
        "amp_mean": jax.random.normal(ks[0], (1, amp_obs_size), jnp.float32) * 0.1,
        "amp_var": jnp.abs(jax.random.normal(ks[1], (1, amp_obs_size), jnp.float32)) + 1.0,
        # _disc_mlp layer 1: Linear(amp_obs_size, 1024)
        "w1": jax.random.normal(ks[2], (amp_obs_size, 1024), jnp.float32) * scale,
        "b1": jnp.zeros((1, 1024), jnp.float32),
        # _disc_mlp layer 2: Linear(1024, hidden_size)
        "w2": jax.random.normal(ks[3], (1024, hidden_size), jnp.float32) * scale,
        "b2": jnp.zeros((1, hidden_size), jnp.float32),
        # _disc_logits: Linear(hidden_size, 1)
        "w3": jax.random.normal(ks[4], (hidden_size, 1), jnp.float32) * scale,
        "b3": jnp.zeros((1, 1), jnp.float32),
        # sigma parameter (constant -2.9, non-trainable) — kept for parity
        "sigma": jnp.full((action_size,), -2.9, jnp.float32),
    }
    return params


# pure-JAX references (f32) for sanity checking
def _discriminate_ref(amp_obs, params):
    norm = (amp_obs - params["amp_mean"]) * jax.lax.rsqrt(params["amp_var"] + 1e-5)
    norm = jnp.clip(norm, -5.0, 5.0)
    h1 = jnp.maximum(norm @ params["w1"] + params["b1"], 0.0)
    h2 = jnp.maximum(h1 @ params["w2"] + params["b2"], 0.0)
    return h2 @ params["w3"] + params["b3"]


def _bound_loss_ref(mu, sb):
    zero = jnp.zeros_like(mu)
    loss = jnp.where(mu > sb, (mu - sb) ** 2, zero)
    loss = jnp.where(mu < -sb, (mu + sb) ** 2, loss)
    return jnp.mean(loss)


# TODO(synk): encode_observations / decode_actions are abstract in the PyTorch module
#             (actor_mlp / critic_mlp are None), so forward() has no defined compute to port.
# TODO(synk): RunningNorm.update (running-mean/var EMA state mutation) is host-side stateful
#             logic and is not implemented as a kernel; only the normalization apply is.
#             eps=1e-5 / clamp [-5,5] mirror the common RunningNorm; verify against the repo.
# TODO(synk): bound_loss keeps a serial SMEM accumulator; switch to per-tile partial sums
#             (finished in the wrapper) only if the kernel ever grows enough to want both v7x TCs.

if __name__ == "__main__":
    key = jax.random.PRNGKey(0)
    B = 8               # batch
    AMP_OBS = 32        # env.amp_observation_space.shape[0]
    HIDDEN = 32         # hidden_size
    ACTION = 16         # env.single_action_space.shape[0]
    SOFT_BOUND = 0.9 * 1.0   # 0.9 * action_space.high[0]

    k_params, k_obs, k_mu = jax.random.split(key, 3)
    params = init_params(k_params, AMP_OBS, HIDDEN, ACTION)
    prepared = prepare_disc_params(params)   # bf16 casts + inv_std, once per parameter update

    amp_obs = jax.random.normal(k_obs, (B, AMP_OBS), jnp.float32)
    mu = jax.random.normal(k_mu, (B, ACTION), jnp.float32) * 1.5

    logits = discriminate(amp_obs, prepared)
    bl = bound_loss(mu, SOFT_BOUND)
    jax.block_until_ready((logits, bl))

    assert logits.shape == (B, 1) and logits.dtype == jnp.float32
    assert bl.shape == () and bl.dtype == jnp.float32

    # correctness sanity check (bf16 matmuls -> loose tolerance on logits)
    logits_ref = _discriminate_ref(amp_obs, params)
    bl_ref = _bound_loss_ref(mu, SOFT_BOUND)
    assert jnp.allclose(logits, logits_ref, rtol=5e-2, atol=5e-2), "discriminate mismatch"
    assert jnp.allclose(bl, bl_ref, rtol=1e-5, atol=1e-6), "bound_loss mismatch"

    print("KERNEL_OK")
</pallas_src>

<mosaic_0001>
module attributes {stable_mosaic.version = 11 : i64} {
  func.func @_disc_kernel(%arg0: i32, %arg1: memref<8x32xf32, #tpu.memory_space<vmem>>, %arg2: memref<1x32xf32, #tpu.memory_space<vmem>>, %arg3: memref<1x32xf32, #tpu.memory_space<vmem>>, %arg4: memref<32x1024xbf16, #tpu.memory_space<vmem>>, %arg5: memref<1x1024xf32, #tpu.memory_space<vmem>>, %arg6: memref<1024x32xbf16, #tpu.memory_space<vmem>>, %arg7: memref<1x32xf32, #tpu.memory_space<vmem>>, %arg8: memref<1x32xf32, #tpu.memory_space<vmem>>, %arg9: memref<1x1xf32, #tpu.memory_space<vmem>>, %arg10: memref<8x1xf32, #tpu.memory_space<vmem>>) attributes {dimension_semantics = [#tpu.dimension_semantics<parallel>], iteration_bounds = array<i64: 1>, scalar_prefetch = 0 : i64, scratch_operands = 0 : i64, tpu.core_type = #tpu.core_type<tc>, window_params = [{transform_indices = @transform_0, window_bounds = array<i64: 8, 32>}, {pipeline_mode = #tpu.pipeline_mode<synchronous>, transform_indices = @transform_1, window_bounds = array<i64: 1, 32>}, {pipeline_mode = #tpu.pipeline_mode<synchronous>, transform_indices = @transform_2, window_bounds = array<i64: 1, 32>}, {pipeline_mode = #tpu.pipeline_mode<synchronous>, transform_indices = @transform_3, window_bounds = array<i64: 32, 1024>}, {pipeline_mode = #tpu.pipeline_mode<synchronous>, transform_indices = @transform_4, window_bounds = array<i64: 1, 1024>}, {pipeline_mode = #tpu.pipeline_mode<synchronous>, transform_indices = @transform_5, window_bounds = array<i64: 1024, 32>}, {pipeline_mode = #tpu.pipeline_mode<synchronous>, transform_indices = @transform_6, window_bounds = array<i64: 1, 32>}, {pipeline_mode = #tpu.pipeline_mode<synchronous>, transform_indices = @transform_7, window_bounds = array<i64: 1, 32>}, {pipeline_mode = #tpu.pipeline_mode<synchronous>, transform_indices = @transform_8, window_bounds = array<i64: 1, 1>}, {transform_indices = @transform_9, window_bounds = array<i64: 8, 1>}]} {
    %c0 = arith.constant 0 : index
    %c0_0 = arith.constant 0 : index
    %0 = vector.load %arg1[%c0, %c0_0] : memref<8x32xf32, #tpu.memory_space<vmem>>, vector<8x32xf32>
    %c0_1 = arith.constant 0 : index
    %c0_2 = arith.constant 0 : index
    %1 = vector.load %arg2[%c0_1, %c0_2] : memref<1x32xf32, #tpu.memory_space<vmem>>, vector<1x32xf32>
    %2 = vector.broadcast %1 : vector<1x32xf32> to vector<8x32xf32>
    %3 = arith.subf %0, %2 : vector<8x32xf32>
    %c0_3 = arith.constant 0 : index
    %c0_4 = arith.constant 0 : index
    %4 = vector.load %arg3[%c0_3, %c0_4] : memref<1x32xf32, #tpu.memory_space<vmem>>, vector<1x32xf32>
    %5 = vector.broadcast %4 : vector<1x32xf32> to vector<8x32xf32>
    %6 = arith.mulf %3, %5 : vector<8x32xf32>
    %cst = arith.constant -5.000000e+00 : f32
    %cst_5 = arith.constant 5.000000e+00 : f32
    %7 = vector.broadcast %cst : f32 to vector<8x32xf32>
    %8 = arith.maximumf %7, %6 : vector<8x32xf32>
    %9 = vector.broadcast %cst_5 : f32 to vector<8x32xf32>
    %10 = arith.minimumf %9, %8 : vector<8x32xf32>
    %11 = arith.truncf %10 : vector<8x32xf32> to vector<8x32xbf16>
    %c0_6 = arith.constant 0 : index
    %c0_7 = arith.constant 0 : index
    %12 = vector.load %arg4[%c0_6, %c0_7] : memref<32x1024xbf16, #tpu.memory_space<vmem>>, vector<32x1024xbf16>
    %cst_8 = arith.constant dense<0.000000e+00> : vector<8x1024xf32>
    %13 = tpu.matmul %11, %12, %cst_8 {dimension_numbers = #tpu.dot_dimension_numbers<[1], [0], [0], [1], [0, 0, 1, 1], [], []>} : vector<8x32xbf16>, vector<32x1024xbf16>, vector<8x1024xf32> -> vector<8x1024xf32>
    %c0_9 = arith.constant 0 : index
    %c0_10 = arith.constant 0 : index
    %14 = vector.load %arg5[%c0_9, %c0_10] : memref<1x1024xf32, #tpu.memory_space<vmem>>, vector<1x1024xf32>
    %15 = vector.broadcast %14 : vector<1x1024xf32> to vector<8x1024xf32>
    %16 = arith.addf %13, %15 : vector<8x1024xf32>
    %cst_11 = arith.constant 0.000000e+00 : f32
    %17 = vector.broadcast %cst_11 : f32 to vector<8x1024xf32>
    %18 = arith.maximumf %16, %17 : vector<8x1024xf32>
    %19 = arith.truncf %18 : vector<8x1024xf32> to vector<8x1024xbf16>
    %c0_12 = arith.constant 0 : index
    %c0_13 = arith.constant 0 : index
    %20 = vector.load %arg6[%c0_12, %c0_13] : memref<1024x32xbf16, #tpu.memory_space<vmem>>, vector<1024x32xbf16>
    %cst_14 = arith.constant dense<0.000000e+00> : vector<8x32xf32>
    %21 = tpu.matmul %19, %20, %cst_14 {dimension_numbers = #tpu.dot_dimension_numbers<[1], [0], [0], [1], [0, 0, 1, 1], [], []>} : vector<8x1024xbf16>, vector<1024x32xbf16>, vector<8x32xf32> -> vector<8x32xf32>
    %c0_15 = arith.constant 0 : index
    %c0_16 = arith.constant 0 : index
    %22 = vector.load %arg7[%c0_15, %c0_16] : memref<1x32xf32, #tpu.memory_space<vmem>>, vector<1x32xf32>
    %23 = vector.broadcast %22 : vector<1x32xf32> to vector<8x32xf32>
    %24 = arith.addf %21, %23 : vector<8x32xf32>
    %cst_17 = arith.constant 0.000000e+00 : f32
    %25 = vector.broadcast %cst_17 : f32 to vector<8x32xf32>
    %26 = arith.maximumf %24, %25 : vector<8x32xf32>
    %c0_18 = arith.constant 0 : index
    %c0_19 = arith.constant 0 : index
    %27 = vector.load %arg8[%c0_18, %c0_19] : memref<1x32xf32, #tpu.memory_space<vmem>>, vector<1x32xf32>
    %28 = vector.broadcast %27 : vector<1x32xf32> to vector<8x32xf32>
    %29 = arith.mulf %26, %28 : vector<8x32xf32>
    %cst_20 = arith.constant dense<0.000000e+00> : vector<8xf32>
    %30 = vector.multi_reduction <add>, %29, %cst_20 [1] : vector<8x32xf32> to vector<8xf32>
    %31 = vector.shape_cast %30 : vector<8xf32> to vector<8x1xf32>
    %c0_21 = arith.constant 0 : index
    %c0_22 = arith.constant 0 : index
    %32 = vector.load %arg9[%c0_21, %c0_22] : memref<1x1xf32, #tpu.memory_space<vmem>>, vector<1x1xf32>
    %33 = vector.broadcast %32 : vector<1x1xf32> to vector<8x1xf32>
    %34 = arith.addf %31, %33 : vector<8x1xf32>
    %c0_23 = arith.constant 0 : index
    %c0_24 = arith.constant 0 : index
    %35 = vector.load %arg10[%c0_23, %c0_24] : memref<8x1xf32, #tpu.memory_space<vmem>>, vector<8x1xf32>
    tpu.vector_store %arg10[%c0_23, %c0_24], %34 {strides = array<i32>} : memref<8x1xf32, #tpu.memory_space<vmem>>, vector<8x1xf32>,
    return
  }
  func.func @transform_0(%arg0: i32) -> (i32, i32) {
    %c0_i32 = arith.constant 0 : i32
    %c0_i32_0 = arith.constant 0 : i32
    return %arg0, %c0_i32 : i32, i32
  }
  func.func @transform_1(%arg0: i32) -> (i32, i32) {
    %c0_i32 = arith.constant 0 : i32
    %c0_i32_0 = arith.constant 0 : i32
    %c0_i32_1 = arith.constant 0 : i32
    return %c0_i32, %c0_i32_0 : i32, i32
  }
  func.func @transform_2(%arg0: i32) -> (i32, i32) {
    %c0_i32 = arith.constant 0 : i32
    %c0_i32_0 = arith.constant 0 : i32
    %c0_i32_1 = arith.constant 0 : i32
    return %c0_i32, %c0_i32_0 : i32, i32
  }
  func.func @transform_3(%arg0: i32) -> (i32, i32) {
    %c0_i32 = arith.constant 0 : i32
    %c0_i32_0 = arith.constant 0 : i32
    %c0_i32_1 = arith.constant 0 : i32
    return %c0_i32, %c0_i32_0 : i32, i32
  }
  func.func @transform_4(%arg0: i32) -> (i32, i32) {
    %c0_i32 = arith.constant 0 : i32
    %c0_i32_0 = arith.constant 0 : i32
    %c0_i32_1 = arith.constant 0 : i32
    return %c0_i32, %c0_i32_0 : i32, i32
  }
  func.func @transform_5(%arg0: i32) -> (i32, i32) {
    %c0_i32 = arith.constant 0 : i32
    %c0_i32_0 = arith.constant 0 : i32
    %c0_i32_1 = arith.constant 0 : i32
    return %c0_i32, %c0_i32_0 : i32, i32
  }
  func.func @transform_6(%arg0: i32) -> (i32, i32) {
    %c0_i32 = arith.constant 0 : i32
    %c0_i32_0 = arith.constant 0 : i32
    %c0_i32_1 = arith.constant 0 : i32
    return %c0_i32, %c0_i32_0 : i32, i32
  }
  func.func @transform_7(%arg0: i32) -> (i32, i32) {
    %c0_i32 = arith.constant 0 : i32
    %c0_i32_0 = arith.constant 0 : i32
    %c0_i32_1 = arith.constant 0 : i32
    return %c0_i32, %c0_i32_0 : i32, i32
  }
  func.func @transform_8(%arg0: i32) -> (i32, i32) {
    %c0_i32 = arith.constant 0 : i32
    %c0_i32_0 = arith.constant 0 : i32
    %c0_i32_1 = arith.constant 0 : i32
    return %c0_i32, %c0_i32_0 : i32, i32
  }
  func.func @transform_9(%arg0: i32) -> (i32, i32) {
    %c0_i32 = arith.constant 0 : i32
    %c0_i32_0 = arith.constant 0 : i32
    return %arg0, %c0_i32 : i32, i32
  }
}

</mosaic_0001>

<llo_original>
// kernel: tpu_custom_call.1
$region0: #{tpu_custom_call.1}
  #allocation0 [shape = 'u32[]', space=smem, size = 0x4, offset = 0x4, fixed_abs, tag = 'smem constant byte address 0x4 - core index']
  #allocation1 [shape = 'u32[144,128]{1,0:T(1,128)}', space=vmem, size = 0x12000, scoped, tag = 'internal scratch']
  #allocation2 [shape = 'f32[1,1]{1,0:T(1,128)S(1)}', space=vmem, size = 0x200, scoped, tag = 'scoped memory for tpu_custom_call.1']
  %s0 = inlined_call_operand.vmem [shape: f32[8,32], index: 0, kind: input, shape index: {}]
  %s1 = inlined_call_operand.vmem [shape: f32[1,32], index: 1, kind: input, shape index: {}]
  %s2 = inlined_call_operand.vmem [shape: f32[1,32], index: 2, kind: input, shape index: {}]
  %s3 = inlined_call_operand.vmem [shape: bf16[32,1024], index: 3, kind: input, shape index: {}]
  %s4 = inlined_call_operand.vmem [shape: f32[1,1024], index: 4, kind: input, shape index: {}]
  %s5 = inlined_call_operand.vmem [shape: bf16[1024,32], index: 5, kind: input, shape index: {}]
  %s6 = inlined_call_operand.vmem [shape: f32[1,32], index: 6, kind: input, shape index: {}]
  %s7 = inlined_call_operand.vmem [shape: f32[1,32], index: 7, kind: input, shape index: {}]
  %s8 = inlined_call_operand.<no memory space> [shape: f32[1,1], index: 8, kind: input, shape index: {}]
  %s9 = inlined_call_operand.vmem [shape: f32[8,1], index: 9, kind: output, shape index: {}]
  %s10 = sld [smem:[#allocation0]]
  $region46: #{tpu_custom_call.1} parent=0
    _
  %s12 = ssub.s32 1, %s10
  %s13 = scalar_select 0, %s12, %s10
  %v14 = vstv %s8
  %15 = vst [vmem:[#allocation2] sm:$0x1] %v14
  // Predicated region
  $region2: #{tpu_custom_call.1} parent=0 // pred_check
    _
  $region3: #{tpu_custom_call.1} parent=0 // pred_check_branch
    %17 = sbr.rel (0) target = $region5
  $region4: #{tpu_custom_call.1} parent=0 // pred_region
    _
  $region5: #{tpu_custom_call.1} parent=0 // pred_fallthru
    _
  // Predicated region
  $region6: #{tpu_custom_call.1} parent=0 // pred_check
    _
  $region7: #{tpu_custom_call.1} parent=0 // pred_check_branch
    %19 = sbr.rel (0) target = $region9
  $region8: #{tpu_custom_call.1} parent=0 // pred_region
    _
  $region9: #{tpu_custom_call.1} parent=0 // pred_fallthru
    _
  // Predicated region
  $region10: #{tpu_custom_call.1} parent=0 // pred_check
    _
  $region11: #{tpu_custom_call.1} parent=0 // pred_check_branch
    %21 = sbr.rel (0) target = $region13
  $region12: #{tpu_custom_call.1} parent=0 // pred_region
    _
  $region13: #{tpu_custom_call.1} parent=0 // pred_fallthru
    _
  // Predicated region
  $region14: #{tpu_custom_call.1} parent=0 // pred_check
    _
  $region15: #{tpu_custom_call.1} parent=0 // pred_check_branch
    %23 = sbr.rel (0) target = $region17
  $region16: #{tpu_custom_call.1} parent=0 // pred_region
    _
  $region17: #{tpu_custom_call.1} parent=0 // pred_fallthru
    _
  // Predicated region
  $region18: #{tpu_custom_call.1} parent=0 // pred_check
    _
  $region19: #{tpu_custom_call.1} parent=0 // pred_check_branch
    %25 = sbr.rel (0) target = $region21
  $region20: #{tpu_custom_call.1} parent=0 // pred_region
    _
  $region21: #{tpu_custom_call.1} parent=0 // pred_fallthru
    _
  // Predicated region
  $region22: #{tpu_custom_call.1} parent=0 // pred_check
    _
  $region23: #{tpu_custom_call.1} parent=0 // pred_check_branch
    %27 = sbr.rel (0) target = $region25
  $region24: #{tpu_custom_call.1} parent=0 // pred_region
    _
  $region25: #{tpu_custom_call.1} parent=0 // pred_fallthru
    _
  // Predicated region
  $region26: #{tpu_custom_call.1} parent=0 // pred_check
    _
  $region27: #{tpu_custom_call.1} parent=0 // pred_check_branch
    %29 = sbr.rel (0) target = $region29
  $region28: #{tpu_custom_call.1} parent=0 // pred_region
    _
  $region29: #{tpu_custom_call.1} parent=0 // pred_fallthru
    _
  // Predicated region
  $region30: #{tpu_custom_call.1} parent=0 // pred_check
    _
  $region31: #{tpu_custom_call.1} parent=0 // pred_check_branch
    %31 = sbr.rel (0) target = $region33
  $region32: #{tpu_custom_call.1} parent=0 // pred_region
    _
  $region33: #{tpu_custom_call.1} parent=0 // pred_fallthru
    _
  // Predicated region
  $region34: #{tpu_custom_call.1} parent=0 // pred_check
    _
  $region35: #{tpu_custom_call.1} parent=0 // pred_check_branch
    %33 = sbr.rel (0) target = $region37
  $region36: #{tpu_custom_call.1} parent=0 // pred_region
    _
  $region37: #{tpu_custom_call.1} parent=0 // pred_fallthru
    _
  %v35 = vld [vmem:[%s0] sm:$0xff]
  %v36 = vld [vmem:[%s1] sm:$0x1]
  %v38 = vlaneseq
  %v39 = vshrl.u32 %v38, 7
  %v40 = vsub.s32 0, %v39
  %v41 = vrot.slane %v36, %v40
  %v43 = vsub.f32 %v35, %v41
  %v44 = vld [vmem:[%s2] sm:$0x1]
  %v46 = vlaneseq
  %v47 = vshrl.u32 %v46, 7
  %v48 = vsub.s32 0, %v47
  %v49 = vrot.slane %v44, %v48
  %v51 = vmul.f32 %v43, %v49
  %v52 = vmax.f32 %v51, -5.0
  %v53 = vmin.f32 %v52, 5.0
  %v54 = vpack.c.bf16 %v53, %v53
  %v55 = vld [vmem:[%s3] sm:$0xff]
  %v56 = vld [vmem:[%s3 + $0x8] sm:$0xff]
  %v57 = vld [vmem:[%s3 + $0x10] sm:$0xff]
  %v58 = vld [vmem:[%s3 + $0x18] sm:$0xff]
  %v59 = vld [vmem:[%s3 + $0x20] sm:$0xff]
  %v60 = vld [vmem:[%s3 + $0x28] sm:$0xff]
  %v61 = vld [vmem:[%s3 + $0x30] sm:$0xff]
  %v62 = vld [vmem:[%s3 + $0x38] sm:$0xff]
  %v63 = vld [vmem:[%s3 + $0x40] sm:$0xff]
  %v64 = vld [vmem:[%s3 + $0x48] sm:$0xff]
  %v65 = vld [vmem:[%s3 + $0x50] sm:$0xff]
  %v66 = vld [vmem:[%s3 + $0x58] sm:$0xff]
  %v67 = vld [vmem:[%s3 + $0x60] sm:$0xff]
  %v68 = vld [vmem:[%s3 + $0x68] sm:$0xff]
  %v69 = vld [vmem:[%s3 + $0x70] sm:$0xff]
  %v70 = vld [vmem:[%s3 + $0x78] sm:$0xff]
  %v71 = vld [vmem:[%s4] sm:$0xff]
  %v73 = vlaneseq
  %v74 = vshrl.u32 %v73, 7
  %v75 = vsub.s32 0, %v74
  %v76 = vrot.slane %v71, %v75
  %v77 = vlaneseq
  %v78 = vshrl.u32 %v77, 7
  %v79 = vsub.s32 1, %v78
  %v80 = vrot.slane %v71, %v79
  %v81 = vlaneseq
  %v82 = vshrl.u32 %v81, 7
  %v83 = vsub.s32 2, %v82
  %v84 = vrot.slane %v71, %v83
  %v85 = vlaneseq
  %v86 = vshrl.u32 %v85, 7
  %v87 = vsub.s32 3, %v86
  %v88 = vrot.slane %v71, %v87
  %v89 = vlaneseq
  %v90 = vshrl.u32 %v89, 7
  %v91 = vsub.s32 4, %v90
  %v92 = vrot.slane %v71, %v91
  %v93 = vlaneseq
  %v94 = vshrl.u32 %v93, 7
  %v95 = vsub.s32 5, %v94
  %v96 = vrot.slane %v71, %v95
  %v97 = vlaneseq
  %v98 = vshrl.u32 %v97, 7
  %v99 = vsub.s32 6, %v98
  %v100 = vrot.slane %v71, %v99
  %v101 = vlaneseq
  %v102 = vshrl.u32 %v101, 7
  %v103 = vsub.s32 7, %v102
  %v104 = vrot.slane %v71, %v103
  %v129 = vunpack.c.l.b16 %v55
  %v130 = vunpack.c.h.b16 %v55
  %v131 = vunpack.c.l.b16 %v56
  %v132 = vunpack.c.h.b16 %v56
  %v133 = vunpack.c.l.b16 %v57
  %v134 = vunpack.c.h.b16 %v57
  %v135 = vunpack.c.l.b16 %v58
  %v136 = vunpack.c.h.b16 %v58
  %v137 = vunpack.c.l.b16 %v59
  %v138 = vunpack.c.h.b16 %v59
  %v139 = vunpack.c.l.b16 %v60
  %v140 = vunpack.c.h.b16 %v60
  %v141 = vunpack.c.l.b16 %v61
  %v142 = vunpack.c.h.b16 %v61
  %v143 = vunpack.c.l.b16 %v62
  %v144 = vunpack.c.h.b16 %v62
  %v145 = vunpack.c.l.b16 %v63
  %v146 = vunpack.c.h.b16 %v63
  %v147 = vunpack.c.l.b16 %v64
  %v148 = vunpack.c.h.b16 %v64
  %v149 = vunpack.c.l.b16 %v65
  %v150 = vunpack.c.h.b16 %v65
  %v151 = vunpack.c.l.b16 %v66
  %v152 = vunpack.c.h.b16 %v66
  %v153 = vunpack.c.l.b16 %v67
  %v154 = vunpack.c.h.b16 %v67
  %v155 = vunpack.c.l.b16 %v68
  %v156 = vunpack.c.h.b16 %v68
  %v157 = vunpack.c.l.b16 %v69
  %v158 = vunpack.c.h.b16 %v69
  %v159 = vunpack.c.l.b16 %v70
  %v160 = vunpack.c.h.b16 %v70
  %v161 = vpack.c.b16 %v137, %v129
  %v162 = vpack.c.b16 %v138, %v130
  %v163 = vpack.c.b16 %v139, %v131
  %v164 = vpack.c.b16 %v140, %v132
  %v165 = vpack.c.b16 %v141, %v133
  %v166 = vpack.c.b16 %v142, %v134
  %v167 = vpack.c.b16 %v143, %v135
  %v168 = vpack.c.b16 %v144, %v136
  %v169 = vpack.c.b16 %v153, %v145
  %v170 = vpack.c.b16 %v154, %v146
  %v171 = vpack.c.b16 %v155, %v147
  %v172 = vpack.c.b16 %v156, %v148
  %v173 = vpack.c.b16 %v157, %v149
  %v174 = vpack.c.b16 %v158, %v150
  %v175 = vpack.c.b16 %v159, %v151
  %v176 = vpack.c.b16 %v160, %v152
  %vm193 = vcmask 261120
  %v195 = vsel %vm193, %v54, 0
  %197 = vmatprep.subr.bf16.mxu0 0
  %198 = vmatpush1.bf16.msra.mxu0 0
  %199 = vmatprep.subr.bf16.mxu0 0
  %200 = vmatpush1.bf16.msra.mxu0 0
  %201 = vmatprep.subr.bf16.mxu0 0
  %202 = vmatpush1.bf16.msra.mxu0 0
  %203 = vmatprep.subr.bf16.mxu0 0
  %204 = vmatpush1.bf16.msra.mxu0 0
  %205 = vmatprep.subr.bf16.mxu0 0
  %206 = vmatpush1.bf16.msra.mxu0 0
  %207 = vmatprep.subr.bf16.mxu0 0
  %208 = vmatpush1.bf16.msra.mxu0 0
  %209 = vmatprep.subr.bf16.mxu0 %v170
  %210 = vmatpush1.bf16.msra.mxu0 %v169
  %211 = vmatprep.subr.bf16.mxu0 %v162
  %212 = vmatpush1.bf16.msra.mxu0 %v161
  %213 = vmatprep.subr.bf16.mxu0 0
  %214 = vmatpush2.bf16.msra.mxu0 0
  %215 = vmatprep.subr.bf16.mxu0 0
  %216 = vmatpush2.bf16.msra.mxu0 0
  %217 = vmatprep.subr.bf16.mxu0 0
  %218 = vmatpush2.bf16.msra.mxu0 0
  %219 = vmatprep.subr.bf16.mxu0 0
  %220 = vmatpush2.bf16.msra.mxu0 0
  %221 = vmatprep.subr.bf16.mxu0 0
  %222 = vmatpush2.bf16.msra.mxu0 0
  %223 = vmatprep.subr.bf16.mxu0 0
  %224 = vmatpush2.bf16.msra.mxu0 0
  %225 = vmatprep.subr.bf16.mxu0 0
  %226 = vmatpush2.bf16.msra.mxu0 0
  %227 = vmatprep.subr.bf16.mxu0 0
  %228 = vmatpush2.bf16.msra.mxu0 0
  %229 = vmatprep.mubr.bf16.mxu0 0
  %230 = vmatmul.mubr.bf16.gmra.mxu0 %v195
  %v231 = vpop.f32.mrf.mxu0
  %v232 = vadd.f32 %v76, %v231
  %v233 = vpop.f32.mrf.mxu0
  %v234 = vadd.f32 %v80, %v233
  %v235 = vpop.f32.mrf.mxu0
  %v236 = vpop.f32.mrf.mxu0
  %237 = vdwg.mxu0
  %238 = vmatprep.subr.bf16.mxu0 0
  %239 = vmatpush1.bf16.msra.mxu0 0
  %240 = vmatprep.subr.bf16.mxu0 0
  %241 = vmatpush1.bf16.msra.mxu0 0
  %242 = vmatprep.subr.bf16.mxu0 0
  %243 = vmatpush1.bf16.msra.mxu0 0
  %244 = vmatprep.subr.bf16.mxu0 0
  %245 = vmatpush1.bf16.msra.mxu0 0
  %246 = vmatprep.subr.bf16.mxu0 0
  %247 = vmatpush1.bf16.msra.mxu0 0
  %248 = vmatprep.subr.bf16.mxu0 0
  %249 = vmatpush1.bf16.msra.mxu0 0
  %250 = vmatprep.subr.bf16.mxu0 %v172
  %251 = vmatpush1.bf16.msra.mxu0 %v171
  %252 = vmatprep.subr.bf16.mxu0 %v164
  %253 = vmatpush1.bf16.msra.mxu0 %v163
  %254 = vmatprep.subr.bf16.mxu0 0
  %255 = vmatpush2.bf16.msra.mxu0 0
  %256 = vmatprep.subr.bf16.mxu0 0
  %257 = vmatpush2.bf16.msra.mxu0 0
  %258 = vmatprep.subr.bf16.mxu0 0
  %259 = vmatpush2.bf16.msra.mxu0 0
  %260 = vmatprep.subr.bf16.mxu0 0
  %261 = vmatpush2.bf16.msra.mxu0 0
  %262 = vmatprep.subr.bf16.mxu0 0
  %263 = vmatpush2.bf16.msra.mxu0 0
  %264 = vmatprep.subr.bf16.mxu0 0
  %265 = vmatpush2.bf16.msra.mxu0 0
  %266 = vmatprep.subr.bf16.mxu0 0
  %267 = vmatpush2.bf16.msra.mxu0 0
  %268 = vmatprep.subr.bf16.mxu0 0
  %269 = vmatpush2.bf16.msra.mxu0 0
  %270 = vmatprep.mubr.bf16.mxu0 0
  %271 = vmatmul.mubr.bf16.gmra.mxu0 %v195
  %v272 = vpop.f32.mrf.mxu0
  %v273 = vadd.f32 %v84, %v272
  %v274 = vpop.f32.mrf.mxu0
  %v275 = vadd.f32 %v88, %v274
  %v276 = vpop.f32.mrf.mxu0
  %v277 = vpop.f32.mrf.mxu0
  %278 = vdwg.mxu0
  %279 = vmatprep.subr.bf16.mxu0 0
  %280 = vmatpush1.bf16.msra.mxu0 0
  %281 = vmatprep.subr.bf16.mxu0 0
  %282 = vmatpush1.bf16.msra.mxu0 0
  %283 = vmatprep.subr.bf16.mxu0 0
  %284 = vmatpush1.bf16.msra.mxu0 0
  %285 = vmatprep.subr.bf16.mxu0 0
  %286 = vmatpush1.bf16.msra.mxu0 0
  %287 = vmatprep.subr.bf16.mxu0 0
  %288 = vmatpush1.bf16.msra.mxu0 0
  %289 = vmatprep.subr.bf16.mxu0 0
  %290 = vmatpush1.bf16.msra.mxu0 0
  %291 = vmatprep.subr.bf16.mxu0 %v174
  %292 = vmatpush1.bf16.msra.mxu0 %v173
  %293 = vmatprep.subr.bf16.mxu0 %v166
  %294 = vmatpush1.bf16.msra.mxu0 %v165
  %295 = vmatprep.subr.bf16.mxu0 0
  %296 = vmatpush2.bf16.msra.mxu0 0
  %297 = vmatprep.subr.bf16.mxu0 0
  %298 = vmatpush2.bf16.msra.mxu0 0
  %299 = vmatprep.subr.bf16.mxu0 0
  %300 = vmatpush2.bf16.msra.mxu0 0
  %301 = vmatprep.subr.bf16.mxu0 0
  %302 = vmatpush2.bf16.msra.mxu0 0
  %303 = vmatprep.subr.bf16.mxu0 0
  %304 = vmatpush2.bf16.msra.mxu0 0
  %305 = vmatprep.subr.bf16.mxu0 0
  %306 = vmatpush2.bf16.msra.mxu0 0
  %307 = vmatprep.subr.bf16.mxu0 0
  %308 = vmatpush2.bf16.msra.mxu0 0
  %309 = vmatprep.subr.bf16.mxu0 0
  %310 = vmatpush2.bf16.msra.mxu0 0
  %311 = vmatprep.mubr.bf16.mxu0 0
  %312 = vmatmul.mubr.bf16.gmra.mxu0 %v195
  %v313 = vpop.f32.mrf.mxu0
  %v314 = vadd.f32 %v92, %v313
  %v315 = vpop.f32.mrf.mxu0
  %v316 = vadd.f32 %v96, %v315
  %v317 = vpop.f32.mrf.mxu0
  %v318 = vpop.f32.mrf.mxu0
  %319 = vdwg.mxu0
  %320 = vmatprep.subr.bf16.mxu0 0
  %321 = vmatpush1.bf16.msra.mxu0 0
  %322 = vmatprep.subr.bf16.mxu0 0
  %323 = vmatpush1.bf16.msra.mxu0 0
  %324 = vmatprep.subr.bf16.mxu0 0
  %325 = vmatpush1.bf16.msra.mxu0 0
  %326 = vmatprep.subr.bf16.mxu0 0
  %327 = vmatpush1.bf16.msra.mxu0 0
  %328 = vmatprep.subr.bf16.mxu0 0
  %329 = vmatpush1.bf16.msra.mxu0 0
  %330 = vmatprep.subr.bf16.mxu0 0
  %331 = vmatpush1.bf16.msra.mxu0 0
  %332 = vmatprep.subr.bf16.mxu0 %v176
  %333 = vmatpush1.bf16.msra.mxu0 %v175
  %334 = vmatprep.subr.bf16.mxu0 %v168
  %335 = vmatpush1.bf16.msra.mxu0 %v167
  %336 = vmatprep.subr.bf16.mxu0 0
  %337 = vmatpush2.bf16.msra.mxu0 0
  %338 = vmatprep.subr.bf16.mxu0 0
  %339 = vmatpush2.bf16.msra.mxu0 0
  %340 = vmatprep.subr.bf16.mxu0 0
  %341 = vmatpush2.bf16.msra.mxu0 0
  %342 = vmatprep.subr.bf16.mxu0 0
  %343 = vmatpush2.bf16.msra.mxu0 0
  %344 = vmatprep.subr.bf16.mxu0 0
  %345 = vmatpush2.bf16.msra.mxu0 0
  %346 = vmatprep.subr.bf16.mxu0 0
  %347 = vmatpush2.bf16.msra.mxu0 0
  %348 = vmatprep.subr.bf16.mxu0 0
  %349 = vmatpush2.bf16.msra.mxu0 0
  %350 = vmatprep.subr.bf16.mxu0 0
  %351 = vmatpush2.bf16.msra.mxu0 0
  %352 = vmatprep.mubr.bf16.mxu0 0
  %353 = vmatmul.mubr.bf16.gmra.mxu0 %v195
  %v354 = vpop.f32.mrf.mxu0
  %v355 = vadd.f32 %v100, %v354
  %v356 = vpop.f32.mrf.mxu0
  %v357 = vadd.f32 %v104, %v356
  %v358 = vpop.f32.mrf.mxu0
  %v359 = vpop.f32.mrf.mxu0
  %360 = vdwg.mxu0
  %v361 = vmax.f32 %v232, 0.0
  %v362 = vmax.f32 %v234, 0.0
  %v363 = vmax.f32 %v273, 0.0
  %v364 = vmax.f32 %v275, 0.0
  %v365 = vmax.f32 %v314, 0.0
  %v366 = vmax.f32 %v316, 0.0
  %v367 = vmax.f32 %v355, 0.0
  %v368 = vmax.f32 %v357, 0.0
  %v369 = vpack.c.bf16 %v361, %v361
  %v370 = vpack.c.bf16 %v362, %v362
  %v371 = vpack.c.bf16 %v363, %v363
  %v372 = vpack.c.bf16 %v364, %v364
  %v373 = vpack.c.bf16 %v365, %v365
  %v374 = vpack.c.bf16 %v366, %v366
  %v375 = vpack.c.bf16 %v367, %v367
  %v376 = vpack.c.bf16 %v368, %v368
  %v377 = vld [vmem:[%s5] sm:$0xf]
  %v378 = vld [vmem:[%s5 + $0x4] sm:$0xf]
  %v379 = vld [vmem:[%s5 + $0x8] sm:$0xf]
  %v380 = vld [vmem:[%s5 + $0xc] sm:$0xf]
  %v381 = vld [vmem:[%s5 + $0x10] sm:$0xf]
  %v382 = vld [vmem:[%s5 + $0x14] sm:$0xf]
  %v383 = vld [vmem:[%s5 + $0x18] sm:$0xf]
  %v384 = vld [vmem:[%s5 + $0x1c] sm:$0xf]
  %v385 = vld [vmem:[%s5 + $0x20] sm:$0xf]
  %v386 = vld [vmem:[%s5 + $0x24] sm:$0xf]
  %v387 = vld [vmem:[%s5 + $0x28] sm:$0xf]
  %v388 = vld [vmem:[%s5 + $0x2c] sm:$0xf]
  %v389 = vld [vmem:[%s5 + $0x30] sm:$0xf]
  %v390 = vld [vmem:[%s5 + $0x34] sm:$0xf]
  %v391 = vld [vmem:[%s5 + $0x38] sm:$0xf]
  %v392 = vld [vmem:[%s5 + $0x3c] sm:$0xf]
  %v393 = vld [vmem:[%s5 + $0x40] sm:$0xf]
  %v394 = vld [vmem:[%s5 + $0x44] sm:$0xf]
  %v395 = vld [vmem:[%s5 + $0x48] sm:$0xf]
  %v396 = vld [vmem:[%s5 + $0x4c] sm:$0xf]
  %v397 = vld [vmem:[%s5 + $0x50] sm:$0xf]
  %v398 = vld [vmem:[%s5 + $0x54] sm:$0xf]
  %v399 = vld [vmem:[%s5 + $0x58] sm:$0xf]
  %v400 = vld [vmem:[%s5 + $0x5c] sm:$0xf]
  %v401 = vld [vmem:[%s5 + $0x60] sm:$0xf]
  %v402 = vld [vmem:[%s5 + $0x64] sm:$0xf]
  %v403 = vld [vmem:[%s5 + $0x68] sm:$0xf]
  %v404 = vld [vmem:[%s5 + $0x6c] sm:$0xf]
  %v405 = vld [vmem:[%s5 + $0x70] sm:$0xf]
  %v406 = vld [vmem:[%s5 + $0x74] sm:$0xf]
  %v407 = vld [vmem:[%s5 + $0x78] sm:$0xf]
  %v408 = vld [vmem:[%s5 + $0x7c] sm:$0xf]
  %v409 = vld [vmem:[%s5 + $0x80] sm:$0xf]
  %v410 = vld [vmem:[%s5 + $0x84] sm:$0xf]
  %v411 = vld [vmem:[%s5 + $0x88] sm:$0xf]
  %v412 = vld [vmem:[%s5 + $0x8c] sm:$0xf]
  %v413 = vld [vmem:[%s5 + $0x90] sm:$0xf]
  %v414 = vld [vmem:[%s5 + $0x94] sm:$0xf]
  %v415 = vld [vmem:[%s5 + $0x98] sm:$0xf]
  %v416 = vld [vmem:[%s5 + $0x9c] sm:$0xf]
  %v417 = vld [vmem:[%s5 + $0xa0] sm:$0xf]
  %v418 = vld [vmem:[%s5 + $0xa4] sm:$0xf]
  %v419 = vld [vmem:[%s5 + $0xa8] sm:$0xf]
  %v420 = vld [vmem:[%s5 + $0xac] sm:$0xf]
  %v421 = vld [vmem:[%s5 + $0xb0] sm:$0xf]
  %v422 = vld [vmem:[%s5 + $0xb4] sm:$0xf]
  %v423 = vld [vmem:[%s5 + $0xb8] sm:$0xf]
  %v424 = vld [vmem:[%s5 + $0xbc] sm:$0xf]
  %v425 = vld [vmem:[%s5 + $0xc0] sm:$0xf]
  %v426 = vld [vmem:[%s5 + $0xc4] sm:$0xf]
  %v427 = vld [vmem:[%s5 + $0xc8] sm:$0xf]
  %v428 = vld [vmem:[%s5 + $0xcc] sm:$0xf]
  %v429 = vld [vmem:[%s5 + $0xd0] sm:$0xf]
  %v430 = vld [vmem:[%s5 + $0xd4] sm:$0xf]
  %v431 = vld [vmem:[%s5 + $0xd8] sm:$0xf]
  %v432 = vld [vmem:[%s5 + $0xdc] sm:$0xf]
  %v433 = vld [vmem:[%s5 + $0xe0] sm:$0xf]
  %v434 = vld [vmem:[%s5 + $0xe4] sm:$0xf]
  %v435 = vld [vmem:[%s5 + $0xe8] sm:$0xf]
  %v436 = vld [vmem:[%s5 + $0xec] sm:$0xf]
  %v437 = vld [vmem:[%s5 + $0xf0] sm:$0xf]
  %v438 = vld [vmem:[%s5 + $0xf4] sm:$0xf]
  %v439 = vld [vmem:[%s5 + $0xf8] sm:$0xf]
  %v440 = vld [vmem:[%s5 + $0xfc] sm:$0xf]
  %v441 = vld [vmem:[%s5 + $0x100] sm:$0xf]
  %v442 = vld [vmem:[%s5 + $0x104] sm:$0xf]
  %v443 = vld [vmem:[%s5 + $0x108] sm:$0xf]
  %v444 = vld [vmem:[%s5 + $0x10c] sm:$0xf]
  %v445 = vld [vmem:[%s5 + $0x110] sm:$0xf]
  %v446 = vld [vmem:[%s5 + $0x114] sm:$0xf]
  %v447 = vld [vmem:[%s5 + $0x118] sm:$0xf]
  %v448 = vld [vmem:[%s5 + $0x11c] sm:$0xf]
  %v449 = vld [vmem:[%s5 + $0x120] sm:$0xf]
  %v450 = vld [vmem:[%s5 + $0x124] sm:$0xf]
  %v451 = vld [vmem:[%s5 + $0x128] sm:$0xf]
  %v452 = vld [vmem:[%s5 + $0x12c] sm:$0xf]
  %v453 = vld [vmem:[%s5 + $0x130] sm:$0xf]
  %v454 = vld [vmem:[%s5 + $0x134] sm:$0xf]
  %v455 = vld [vmem:[%s5 + $0x138] sm:$0xf]
  %v456 = vld [vmem:[%s5 + $0x13c] sm:$0xf]
  %v457 = vld [vmem:[%s5 + $0x140] sm:$0xf]
  %v458 = vld [vmem:[%s5 + $0x144] sm:$0xf]
  %v459 = vld [vmem:[%s5 + $0x148] sm:$0xf]
  %v460 = vld [vmem:[%s5 + $0x14c] sm:$0xf]
  %v461 = vld [vmem:[%s5 + $0x150] sm:$0xf]
  %v462 = vld [vmem:[%s5 + $0x154] sm:$0xf]
  %v463 = vld [vmem:[%s5 + $0x158] sm:$0xf]
  %v464 = vld [vmem:[%s5 + $0x15c] sm:$0xf]
  %v465 = vld [vmem:[%s5 + $0x160] sm:$0xf]
  %v466 = vld [vmem:[%s5 + $0x164] sm:$0xf]
  %v467 = vld [vmem:[%s5 + $0x168] sm:$0xf]
  %v468 = vld [vmem:[%s5 + $0x16c] sm:$0xf]
  %v469 = vld [vmem:[%s5 + $0x170] sm:$0xf]
  %v470 = vld [vmem:[%s5 + $0x174] sm:$0xf]
  %v471 = vld [vmem:[%s5 + $0x178] sm:$0xf]
  %v472 = vld [vmem:[%s5 + $0x17c] sm:$0xf]
  %v473 = vld [vmem:[%s5 + $0x180] sm:$0xf]
  %v474 = vld [vmem:[%s5 + $0x184] sm:$0xf]
  %v475 = vld [vmem:[%s5 + $0x188] sm:$0xf]
  %v476 = vld [vmem:[%s5 + $0x18c] sm:$0xf]
  %v477 = vld [vmem:[%s5 + $0x190] sm:$0xf]
  %v478 = vld [vmem:[%s5 + $0x194] sm:$0xf]
  %v479 = vld [vmem:[%s5 + $0x198] sm:$0xf]
  %v480 = vld [vmem:[%s5 + $0x19c] sm:$0xf]
  %v481 = vld [vmem:[%s5 + $0x1a0] sm:$0xf]
  %v482 = vld [vmem:[%s5 + $0x1a4] sm:$0xf]
  %v483 = vld [vmem:[%s5 + $0x1a8] sm:$0xf]
  %v484 = vld [vmem:[%s5 + $0x1ac] sm:$0xf]
  %v485 = vld [vmem:[%s5 + $0x1b0] sm:$0xf]
  %v486 = vld [vmem:[%s5 + $0x1b4] sm:$0xf]
  %v487 = vld [vmem:[%s5 + $0x1b8] sm:$0xf]
  %v488 = vld [vmem:[%s5 + $0x1bc] sm:$0xf]
  %v489 = vld [vmem:[%s5 + $0x1c0] sm:$0xf]
  %v490 = vld [vmem:[%s5 + $0x1c4] sm:$0xf]
  %v491 = vld [vmem:[%s5 + $0x1c8] sm:$0xf]
  %v492 = vld [vmem:[%s5 + $0x1cc] sm:$0xf]
  %v493 = vld [vmem:[%s5 + $0x1d0] sm:$0xf]
  %v494 = vld [vmem:[%s5 + $0x1d4] sm:$0xf]
  %v495 = vld [vmem:[%s5 + $0x1d8] sm:$0xf]
  %v496 = vld [vmem:[%s5 + $0x1dc] sm:$0xf]
  %v497 = vld [vmem:[%s5 + $0x1e0] sm:$0xf]
  %v498 = vld [vmem:[%s5 + $0x1e4] sm:$0xf]
  %v499 = vld [vmem:[%s5 + $0x1e8] sm:$0xf]
  %v500 = vld [vmem:[%s5 + $0x1ec] sm:$0xf]
  %v501 = vld [vmem:[%s5 + $0x1f0] sm:$0xf]
  %v502 = vld [vmem:[%s5 + $0x1f4] sm:$0xf]
  %v503 = vld [vmem:[%s5 + $0x1f8] sm:$0xf]
  %v504 = vld [vmem:[%s5 + $0x1fc] sm:$0xf]
  %v505 = vld [vmem:[%s6] sm:$0x1]
  %v507 = vlaneseq
  %v508 = vshrl.u32 %v507, 7
  %v509 = vsub.s32 0, %v508
  %v510 = vrot.slane %v505, %v509
  %v640 = vunpack.c.l.b16 %v377
  %v641 = vunpack.c.l.b16 %v378
  %v642 = vunpack.c.l.b16 %v379
  %v643 = vunpack.c.l.b16 %v380
  %v644 = vunpack.c.l.b16 %v381
  %v645 = vunpack.c.l.b16 %v382
  %v646 = vunpack.c.l.b16 %v383
  %v647 = vunpack.c.l.b16 %v384
  %v648 = vunpack.c.l.b16 %v385
  %v649 = vunpack.c.l.b16 %v386
  %v650 = vunpack.c.l.b16 %v387
  %v651 = vunpack.c.l.b16 %v388
  %v652 = vunpack.c.l.b16 %v389
  %v653 = vunpack.c.l.b16 %v390
  %v654 = vunpack.c.l.b16 %v391
  %v655 = vunpack.c.l.b16 %v392
  %v656 = vunpack.c.l.b16 %v393
  %v657 = vunpack.c.l.b16 %v394
  %v658 = vunpack.c.l.b16 %v395
  %v659 = vunpack.c.l.b16 %v396
  %v660 = vunpack.c.l.b16 %v397
  %v661 = vunpack.c.l.b16 %v398
  %v662 = vunpack.c.l.b16 %v399
  %v663 = vunpack.c.l.b16 %v400
  %v664 = vunpack.c.l.b16 %v401
  %v665 = vunpack.c.l.b16 %v402
  %v666 = vunpack.c.l.b16 %v403
  %v667 = vunpack.c.l.b16 %v404
  %v668 = vunpack.c.l.b16 %v405
  %v669 = vunpack.c.l.b16 %v406
  %v670 = vunpack.c.l.b16 %v407
  %v671 = vunpack.c.l.b16 %v408
  %v672 = vunpack.c.l.b16 %v409
  %v673 = vunpack.c.l.b16 %v410
  %v674 = vunpack.c.l.b16 %v411
  %v675 = vunpack.c.l.b16 %v412
  %v676 = vunpack.c.l.b16 %v413
  %v677 = vunpack.c.l.b16 %v414
  %v678 = vunpack.c.l.b16 %v415
  %v679 = vunpack.c.l.b16 %v416
  %v680 = vunpack.c.l.b16 %v417
  %v681 = vunpack.c.l.b16 %v418
  %v682 = vunpack.c.l.b16 %v419
  %v683 = vunpack.c.l.b16 %v420
  %v684 = vunpack.c.l.b16 %v421
  %v685 = vunpack.c.l.b16 %v422
  %v686 = vunpack.c.l.b16 %v423
  %v687 = vunpack.c.l.b16 %v424
  %v688 = vunpack.c.l.b16 %v425
  %v689 = vunpack.c.l.b16 %v426
  %v690 = vunpack.c.l.b16 %v427
  %v691 = vunpack.c.l.b16 %v428
  %v692 = vunpack.c.l.b16 %v429
  %v693 = vunpack.c.l.b16 %v430
  %v694 = vunpack.c.l.b16 %v431
  %v695 = vunpack.c.l.b16 %v432
  %v696 = vunpack.c.l.b16 %v433
  %v697 = vunpack.c.l.b16 %v434
  %v698 = vunpack.c.l.b16 %v435
  %v699 = vunpack.c.l.b16 %v436
  %v700 = vunpack.c.l.b16 %v437
  %v701 = vunpack.c.l.b16 %v438
  %v702 = vunpack.c.l.b16 %v439
  %v703 = vunpack.c.l.b16 %v440
  %v704 = vunpack.c.l.b16 %v441
  %v705 = vunpack.c.l.b16 %v442
  %v706 = vunpack.c.l.b16 %v443
  %v707 = vunpack.c.l.b16 %v444
  %v708 = vunpack.c.l.b16 %v445
  %v709 = vunpack.c.l.b16 %v446
  %v710 = vunpack.c.l.b16 %v447
  %v711 = vunpack.c.l.b16 %v448
  %v712 = vunpack.c.l.b16 %v449
  %v713 = vunpack.c.l.b16 %v450
  %v714 = vunpack.c.l.b16 %v451
  %v715 = vunpack.c.l.b16 %v452
  %v716 = vunpack.c.l.b16 %v453
  %v717 = vunpack.c.l.b16 %v454
  %v718 = vunpack.c.l.b16 %v455
  %v719 = vunpack.c.l.b16 %v456
  %v720 = vunpack.c.l.b16 %v457
  %v721 = vunpack.c.l.b16 %v458
  %v722 = vunpack.c.l.b16 %v459
  %v723 = vunpack.c.l.b16 %v460
  %v724 = vunpack.c.l.b16 %v461
  %v725 = vunpack.c.l.b16 %v462
  %v726 = vunpack.c.l.b16 %v463
  %v727 = vunpack.c.l.b16 %v464
  %v728 = vunpack.c.l.b16 %v465
  %v729 = vunpack.c.l.b16 %v466
  %v730 = vunpack.c.l.b16 %v467
  %v731 = vunpack.c.l.b16 %v468
  %v732 = vunpack.c.l.b16 %v469
  %v733 = vunpack.c.l.b16 %v470
  %v734 = vunpack.c.l.b16 %v471
  %v735 = vunpack.c.l.b16 %v472
  %v736 = vunpack.c.l.b16 %v473
  %v737 = vunpack.c.l.b16 %v474
  %v738 = vunpack.c.l.b16 %v475
  %v739 = vunpack.c.l.b16 %v476
  %v740 = vunpack.c.l.b16 %v477
  %v741 = vunpack.c.l.b16 %v478
  %v742 = vunpack.c.l.b16 %v479
  %v743 = vunpack.c.l.b16 %v480
  %v744 = vunpack.c.l.b16 %v481
  %v745 = vunpack.c.l.b16 %v482
  %v746 = vunpack.c.l.b16 %v483
  %v747 = vunpack.c.l.b16 %v484
  %v748 = vunpack.c.l.b16 %v485
  %v749 = vunpack.c.l.b16 %v486
  %v750 = vunpack.c.l.b16 %v487
  %v751 = vunpack.c.l.b16 %v488
  %v752 = vunpack.c.l.b16 %v489
  %v753 = vunpack.c.l.b16 %v490
  %v754 = vunpack.c.l.b16 %v491
  %v755 = vunpack.c.l.b16 %v492
  %v756 = vunpack.c.l.b16 %v493
  %v757 = vunpack.c.l.b16 %v494
  %v758 = vunpack.c.l.b16 %v495
  %v759 = vunpack.c.l.b16 %v496
  %v760 = vunpack.c.l.b16 %v497
  %v761 = vunpack.c.l.b16 %v498
  %v762 = vunpack.c.l.b16 %v499
  %v763 = vunpack.c.l.b16 %v500
  %v764 = vunpack.c.l.b16 %v501
  %v765 = vunpack.c.l.b16 %v502
  %v766 = vunpack.c.l.b16 %v503
  %v767 = vunpack.c.l.b16 %v504
  %v768 = vpack.c.b16 %v641, %v640
  %v769 = vpack.c.b16 %v643, %v642
  %v770 = vpack.c.b16 %v645, %v644
  %v771 = vpack.c.b16 %v647, %v646
  %v772 = vpack.c.b16 %v649, %v648
  %v773 = vpack.c.b16 %v651, %v650
  %v774 = vpack.c.b16 %v653, %v652
  %v775 = vpack.c.b16 %v655, %v654
  %v776 = vpack.c.b16 %v657, %v656
  %v777 = vpack.c.b16 %v659, %v658
  %v778 = vpack.c.b16 %v661, %v660
  %v779 = vpack.c.b16 %v663, %v662
  %v780 = vpack.c.b16 %v665, %v664
  %v781 = vpack.c.b16 %v667, %v666
  %v782 = vpack.c.b16 %v669, %v668
  %v783 = vpack.c.b16 %v671, %v670
  %v784 = vpack.c.b16 %v673, %v672
  %v785 = vpack.c.b16 %v675, %v674
  %v786 = vpack.c.b16 %v677, %v676
  %v787 = vpack.c.b16 %v679, %v678
  %v788 = vpack.c.b16 %v681, %v680
  %v789 = vpack.c.b16 %v683, %v682
  %v790 = vpack.c.b16 %v685, %v684
  %v791 = vpack.c.b16 %v687, %v686
  %v792 = vpack.c.b16 %v689, %v688
  %v793 = vpack.c.b16 %v691, %v690
  %v794 = vpack.c.b16 %v693, %v692
  %v795 = vpack.c.b16 %v695, %v694
  %v796 = vpack.c.b16 %v697, %v696
  %v797 = vpack.c.b16 %v699, %v698
  %v798 = vpack.c.b16 %v701, %v700
  %v799 = vpack.c.b16 %v703, %v702
  %v800 = vpack.c.b16 %v705, %v704
  %v801 = vpack.c.b16 %v707, %v706
  %v802 = vpack.c.b16 %v709, %v708
  %v803 = vpack.c.b16 %v711, %v710
  %v804 = vpack.c.b16 %v713, %v712
  %v805 = vpack.c.b16 %v715, %v714
  %v806 = vpack.c.b16 %v717, %v716
  %v807 = vpack.c.b16 %v719, %v718
  %v808 = vpack.c.b16 %v721, %v720
  %v809 = vpack.c.b16 %v723, %v722
  %v810 = vpack.c.b16 %v725, %v724
  %v811 = vpack.c.b16 %v727, %v726
  %v812 = vpack.c.b16 %v729, %v728
  %v813 = vpack.c.b16 %v731, %v730
  %v814 = vpack.c.b16 %v733, %v732
  %v815 = vpack.c.b16 %v735, %v734
  %v816 = vpack.c.b16 %v737, %v736
  %v817 = vpack.c.b16 %v739, %v738
  %v818 = vpack.c.b16 %v741, %v740
  %v819 = vpack.c.b16 %v743, %v742
  %v820 = vpack.c.b16 %v745, %v744
  %v821 = vpack.c.b16 %v747, %v746
  %v822 = vpack.c.b16 %v749, %v748
  %v823 = vpack.c.b16 %v751, %v750
  %v824 = vpack.c.b16 %v753, %v752
  %v825 = vpack.c.b16 %v755, %v754
  %v826 = vpack.c.b16 %v757, %v756
  %v827 = vpack.c.b16 %v759, %v758
  %v828 = vpack.c.b16 %v761, %v760
  %v829 = vpack.c.b16 %v763, %v762
  %v830 = vpack.c.b16 %v765, %v764
  %v831 = vpack.c.b16 %v767, %v766
  %896 = vmatprep.subr.bf16.mxu0 0
  %897 = vmatpush1.bf16.msra.mxu0 %v775
  %898 = vmatprep.subr.bf16.mxu0 0
  %899 = vmatpush1.bf16.msra.mxu0 %v774
  %900 = vmatprep.subr.bf16.mxu0 0
  %901 = vmatpush1.bf16.msra.mxu0 %v773
  %902 = vmatprep.subr.bf16.mxu0 0
  %903 = vmatpush1.bf16.msra.mxu0 %v772
  %904 = vmatprep.subr.bf16.mxu0 0
  %905 = vmatpush1.bf16.msra.mxu0 %v771
  %906 = vmatprep.subr.bf16.mxu0 0
  %907 = vmatpush1.bf16.msra.mxu0 %v770
  %908 = vmatprep.subr.bf16.mxu0 0
  %909 = vmatpush1.bf16.msra.mxu0 %v769
  %910 = vmatprep.subr.bf16.mxu0 0
  %911 = vmatpush1.bf16.msra.mxu0 %v768
  %912 = vmatprep.subr.bf16.mxu0 0
  %913 = vmatpush2.bf16.msra.mxu0 %v783
  %914 = vmatprep.subr.bf16.mxu0 0
  %915 = vmatpush2.bf16.msra.mxu0 %v782
  %916 = vmatprep.subr.bf16.mxu0 0
  %917 = vmatpush2.bf16.msra.mxu0 %v781
  %918 = vmatprep.subr.bf16.mxu0 0
  %919 = vmatpush2.bf16.msra.mxu0 %v780
  %920 = vmatprep.subr.bf16.mxu0 0
  %921 = vmatpush2.bf16.msra.mxu0 %v779
  %922 = vmatprep.subr.bf16.mxu0 0
  %923 = vmatpush2.bf16.msra.mxu0 %v778
  %924 = vmatprep.subr.bf16.mxu0 0
  %925 = vmatpush2.bf16.msra.mxu0 %v777
  %926 = vmatprep.subr.bf16.mxu0 0
  %927 = vmatpush2.bf16.msra.mxu0 %v776
  %928 = vmatprep.mubr.bf16.mxu0 %v370
  %929 = vmatmul.mubr.bf16.gmra.mxu0 %v369
  %v930 = vpop.f32.mrf.mxu0
  %v931 = vadd.f32 %v510, %v930
  %v932 = vpop.f32.mrf.mxu0
  %v933 = vpop.f32.mrf.mxu0
  %v934 = vpop.f32.mrf.mxu0
  %935 = vdwg.mxu0
  %936 = vmatprep.subr.bf16.mxu0 0
  %937 = vmatpush1.bf16.msra.mxu0 %v791
  %938 = vmatprep.subr.bf16.mxu0 0
  %939 = vmatpush1.bf16.msra.mxu0 %v790
  %940 = vmatprep.subr.bf16.mxu0 0
  %941 = vmatpush1.bf16.msra.mxu0 %v789
  %942 = vmatprep.subr.bf16.mxu0 0
  %943 = vmatpush1.bf16.msra.mxu0 %v788
  %944 = vmatprep.subr.bf16.mxu0 0
  %945 = vmatpush1.bf16.msra.mxu0 %v787
  %946 = vmatprep.subr.bf16.mxu0 0
  %947 = vmatpush1.bf16.msra.mxu0 %v786
  %948 = vmatprep.subr.bf16.mxu0 0
  %949 = vmatpush1.bf16.msra.mxu0 %v785
  %950 = vmatprep.subr.bf16.mxu0 0
  %951 = vmatpush1.bf16.msra.mxu0 %v784
  %952 = vmatprep.subr.bf16.mxu0 0
  %953 = vmatpush2.bf16.msra.mxu0 %v799
  %954 = vmatprep.subr.bf16.mxu0 0
  %955 = vmatpush2.bf16.msra.mxu0 %v798
  %956 = vmatprep.subr.bf16.mxu0 0
  %957 = vmatpush2.bf16.msra.mxu0 %v797
  %958 = vmatprep.subr.bf16.mxu0 0
  %959 = vmatpush2.bf16.msra.mxu0 %v796
  %960 = vmatprep.subr.bf16.mxu0 0
  %961 = vmatpush2.bf16.msra.mxu0 %v795
  %962 = vmatprep.subr.bf16.mxu0 0
  %963 = vmatpush2.bf16.msra.mxu0 %v794
  %964 = vmatprep.subr.bf16.mxu0 0
  %965 = vmatpush2.bf16.msra.mxu0 %v793
  %966 = vmatprep.subr.bf16.mxu0 0
  %967 = vmatpush2.bf16.msra.mxu0 %v792
  %968 = vmatprep.mubr.bf16.mxu0 %v372
  %969 = vmatmul.mubr.bf16.gmra.mxu0 %v371
  %v970 = vpop.f32.mrf.mxu0
  %v971 = vadd.f32 %v931, %v970
  %v972 = vpop.f32.mrf.mxu0
  %v973 = vpop.f32.mrf.mxu0
  %v974 = vpop.f32.mrf.mxu0
  %975 = vdwg.mxu0
  %976 = vmatprep.subr.bf16.mxu0 0
  %977 = vmatpush1.bf16.msra.mxu0 %v807
  %978 = vmatprep.subr.bf16.mxu0 0
  %979 = vmatpush1.bf16.msra.mxu0 %v806
  %980 = vmatprep.subr.bf16.mxu0 0
  %981 = vmatpush1.bf16.msra.mxu0 %v805
  %982 = vmatprep.subr.bf16.mxu0 0
  %983 = vmatpush1.bf16.msra.mxu0 %v804
  %984 = vmatprep.subr.bf16.mxu0 0
  %985 = vmatpush1.bf16.msra.mxu0 %v803
  %986 = vmatprep.subr.bf16.mxu0 0
  %987 = vmatpush1.bf16.msra.mxu0 %v802
  %988 = vmatprep.subr.bf16.mxu0 0
  %989 = vmatpush1.bf16.msra.mxu0 %v801
  %990 = vmatprep.subr.bf16.mxu0 0
  %991 = vmatpush1.bf16.msra.mxu0 %v800
  %992 = vmatprep.subr.bf16.mxu0 0
  %993 = vmatpush2.bf16.msra.mxu0 %v815
  %994 = vmatprep.subr.bf16.mxu0 0
  %995 = vmatpush2.bf16.msra.mxu0 %v814
  %996 = vmatprep.subr.bf16.mxu0 0
  %997 = vmatpush2.bf16.msra.mxu0 %v813
  %998 = vmatprep.subr.bf16.mxu0 0
  %999 = vmatpush2.bf16.msra.mxu0 %v812
  %1000 = vmatprep.subr.bf16.mxu0 0
  %1001 = vmatpush2.bf16.msra.mxu0 %v811
  %1002 = vmatprep.subr.bf16.mxu0 0
  %1003 = vmatpush2.bf16.msra.mxu0 %v810
  %1004 = vmatprep.subr.bf16.mxu0 0
  %1005 = vmatpush2.bf16.msra.mxu0 %v809
  %1006 = vmatprep.subr.bf16.mxu0 0
  %1007 = vmatpush2.bf16.msra.mxu0 %v808
  %1008 = vmatprep.mubr.bf16.mxu0 %v374
  %1009 = vmatmul.mubr.bf16.gmra.mxu0 %v373
  %v1010 = vpop.f32.mrf.mxu0
  %v1011 = vadd.f32 %v971, %v1010
  %v1012 = vpop.f32.mrf.mxu0
  %v1013 = vpop.f32.mrf.mxu0
  %v1014 = vpop.f32.mrf.mxu0
  %1015 = vdwg.mxu0
  %1016 = vmatprep.subr.bf16.mxu0 0
  %1017 = vmatpush1.bf16.msra.mxu0 %v823
  %1018 = vmatprep.subr.bf16.mxu0 0
  %1019 = vmatpush1.bf16.msra.mxu0 %v822
  %1020 = vmatprep.subr.bf16.mxu0 0
  %1021 = vmatpush1.bf16.msra.mxu0 %v821
  %1022 = vmatprep.subr.bf16.mxu0 0
  %1023 = vmatpush1.bf16.msra.mxu0 %v820
  %1024 = vmatprep.subr.bf16.mxu0 0
  %1025 = vmatpush1.bf16.msra.mxu0 %v819
  %1026 = vmatprep.subr.bf16.mxu0 0
  %1027 = vmatpush1.bf16.msra.mxu0 %v818
  %1028 = vmatprep.subr.bf16.mxu0 0
  %1029 = vmatpush1.bf16.msra.mxu0 %v817
  %1030 = vmatprep.subr.bf16.mxu0 0
  %1031 = vmatpush1.bf16.msra.mxu0 %v816
  %1032 = vmatprep.subr.bf16.mxu0 0
  %1033 = vmatpush2.bf16.msra.mxu0 %v831
  %1034 = vmatprep.subr.bf16.mxu0 0
  %1035 = vmatpush2.bf16.msra.mxu0 %v830
  %1036 = vmatprep.subr.bf16.mxu0 0
  %1037 = vmatpush2.bf16.msra.mxu0 %v829
  %1038 = vmatprep.subr.bf16.mxu0 0
  %1039 = vmatpush2.bf16.msra.mxu0 %v828
  %1040 = vmatprep.subr.bf16.mxu0 0
  %1041 = vmatpush2.bf16.msra.mxu0 %v827
  %1042 = vmatprep.subr.bf16.mxu0 0
  %1043 = vmatpush2.bf16.msra.mxu0 %v826
  %1044 = vmatprep.subr.bf16.mxu0 0
  %1045 = vmatpush2.bf16.msra.mxu0 %v825
  %1046 = vmatprep.subr.bf16.mxu0 0
  %1047 = vmatpush2.bf16.msra.mxu0 %v824
  %1048 = vmatprep.mubr.bf16.mxu0 %v376
  %1049 = vmatmul.mubr.bf16.gmra.mxu0 %v375
  %v1050 = vpop.f32.mrf.mxu0
  %v1051 = vadd.f32 %v1011, %v1050
  %v1052 = vpop.f32.mrf.mxu0
  %v1053 = vpop.f32.mrf.mxu0
  %v1054 = vpop.f32.mrf.mxu0
  %1055 = vdwg.mxu0
  %v1056 = vmax.f32 %v1051, 0.0
  %v1057 = vld [vmem:[%s7] sm:$0x1]
  %v1059 = vlaneseq
  %v1060 = vshrl.u32 %v1059, 7
  %v1061 = vsub.s32 0, %v1060
  %v1062 = vrot.slane %v1057, %v1061
  %v1064 = vmul.f32 %v1056, %v1062
  %v1065 = vsel %vm193, %v1064, 0.0
  %1066 = vadd.xlane.f32.xlu0 %v1065
  %v1067 = vpop.xlane.xlu0 %1066
  %v1068 = vld [vmem:[#allocation2] sm:$0x1]
  %v1070 = vlaneseq
  %v1071 = vshrl.u32 %v1070, 7
  %v1072 = vsub.s32 0, %v1071
  %v1073 = vrot.slane %v1068, %v1072
  %v1075 = vadd.f32 %v1067, %v1073
  %vm1076 = vcmask 7168
  %1077 = vst.msk [vmem:[%s9] sm:$0xff] %vm1076, %v1075
  // Predicated region
  $region38: #{tpu_custom_call.1} parent=0 // pred_check
    _
  $region39: #{tpu_custom_call.1} parent=0 // pred_check_branch
    %1079 = sbr.rel (0) target = $region41
  $region40: #{tpu_custom_call.1} parent=0 // pred_region
    _
  $region41: #{tpu_custom_call.1} parent=0 // pred_fallthru
    _
  // Predicated region
  $region42: #{tpu_custom_call.1} parent=0 // pred_check
    _
  $region43: #{tpu_custom_call.1} parent=0 // pred_check_branch
    %1081 = sbr.rel (0) target = $region45
  $region44: #{tpu_custom_call.1} parent=0 // pred_region
    _
  $region45: #{tpu_custom_call.1} parent=0 // pred_fallthru
    _

</llo_original>
